<compile_context>
chip_gen: v7x
topology: tpu7x:2x2x1
jax: 0.10.0
libtpu: 0.0.40
codegen_flags: <defaults>
</compile_context>

<pallas_src>
import jax
import jax.numpy as jnp
from jax.experimental import pallas as pl
from jax.experimental.pallas import tpu as pltpu

_MIB = 1024 * 1024
_HEADROOM_BYTES = 8 * _MIB  # Mosaic internal scratch / pipeline slack.


def _leaky_relu(x, slope=0.01):
    # max(x, slope*x) == LeakyReLU for slope in (0, 1): cheaper than where().
    return jnp.maximum(x, slope * x)


def _round_up(n, m):
    return ((n + m - 1) // m) * m


def g_func_kernel(x_ref,
                  w1_ref, b1_ref,
                  w2_ref, b2_ref,
                  w3_ref, b3_ref,
                  w4_ref, b4_ref,
                  w5_ref, b5_ref,
                  o_ref):
    """Entire 5-layer MLP fused; one batch tile per grid step.

    x arrives bf16 (bm, in_dim); W1 is f32 (in_dim, Hp); W2..W5 are bf16
    (lane-dense, hidden padded to Hp, output padded to Op); biases f32 (1, .).
    Activations / accumulation stay f32 (preferred_element_type on every dot).
    """
    in_dim = x_ref.shape[1]
    xf = x_ref[...].astype(jnp.float32)              # (bm, in_dim)

    # ---- layer 1 on the VPU: K == in_dim is tiny, an MXU matmul would pay
    # full fill/drain latency for almost no work. Static unrolled FMA chain.
    h = b1_ref[...]                                  # (1, Hp), broadcasts up
    for k in range(in_dim):
        h = h + xf[:, k:k + 1] * w1_ref[k:k + 1, :]
    h = _leaky_relu(h)                               # (bm, Hp)

    def linear(h, w_ref, b_ref):
        return jnp.dot(h.astype(jnp.bfloat16), w_ref[...],
                       preferred_element_type=jnp.float32) + b_ref[...]

    h = _leaky_relu(linear(h, w2_ref, b2_ref))
    h = _leaky_relu(linear(h, w3_ref, b3_ref))
    h = _leaky_relu(linear(h, w4_ref, b4_ref))
    o_ref[...] = linear(h, w5_ref, b5_ref)           # lane-dense padded store


def _tpu_info():
    """(num_tensorcores_per_device, vmem_capacity_bytes) with safe fallbacks."""
    kind = ""
    try:
        kind = jax.devices()[0].device_kind.lower()
    except Exception:
        pass
    is_v7 = "7" in kind                      # v7x: 2 TCs / device, 64 MiB VMEM
    num_tc = 2 if is_v7 else 1
    vmem_bytes = (64 if is_v7 else 128) * _MIB
    try:
        info = pltpu.get_tpu_info()
        vmem_bytes = int(getattr(info, "vmem_capacity_bytes", vmem_bytes))
    except Exception:
        pass
    return num_tc, vmem_bytes


def _pick_batch_tile(B, num_tc, rows_cap):
    """Generation-aware batch tile.

    Single-TC parts (v5e/v6e): one big step (extra grid steps only add ~0.35us
    per-step overhead, dominant at these weight sizes).  Multi-TC parts (v7x):
    aim for exactly num_tc steps of B/num_tc rows.  Everything capped by the
    VMEM-derived row budget and kept a multiple of 8 that divides B.
    """
    if num_tc <= 1:
        target = min(B, 1024)
    else:
        target = max(B // num_tc, 8)
    target = max(8, min(target, rows_cap, B))
    for c in range(target, 7, -1):
        if c % 8 == 0 and B % c == 0:
            return c
    return B            # tiny / odd batch: whole-batch tile fallback


def g_func_forward(x, params, *, batch_tile=None, single_buffer_weights=None,
                   return_padded=False):
    """x: [B, in_dim] float32. params: dict with w1..w5 ([in,out]), b1..b5 ([1,out])."""
    B, in_dim = x.shape
    hidden = params["w1"].shape[1]
    out_dim = params["w5"].shape[1]

    num_tc, vmem_bytes = _tpu_info()

    hid_p = max(128, _round_up(hidden, 128))
    out_p = max(128, _round_up(out_dim, 128))

    # ---- fold the ones-half of the concat into layer 1's bias -------------
    #   [x, 1] @ W1 + b1  ==  x @ W1[:in_dim] + (b1 + sum(W1[in_dim:], axis=0))
    w1_full = params["w1"]
    w1_eff = w1_full[:in_dim, :]
    b1_eff = params["b1"] + jnp.sum(w1_full[in_dim:, :], axis=0, keepdims=True)

    # ---- lane-dense padding: hidden -> hid_p, output -> out_p (exact) -----
    def pad2(a, rows, cols):
        return jnp.pad(a, ((0, rows - a.shape[0]), (0, cols - a.shape[1])))

    w1_p = pad2(w1_eff, in_dim, hid_p).astype(jnp.float32)     # VPU layer: keep f32
    b1_p = pad2(b1_eff, 1, hid_p).astype(jnp.float32)
    w2_p = pad2(params["w2"], hid_p, hid_p).astype(jnp.bfloat16)
    w3_p = pad2(params["w3"], hid_p, hid_p).astype(jnp.bfloat16)
    w4_p = pad2(params["w4"], hid_p, hid_p).astype(jnp.bfloat16)
    w5_p = pad2(params["w5"], hid_p, out_p).astype(jnp.bfloat16)
    b2_p = pad2(params["b2"], 1, hid_p).astype(jnp.float32)
    b3_p = pad2(params["b3"], 1, hid_p).astype(jnp.float32)
    b4_p = pad2(params["b4"], 1, hid_p).astype(jnp.float32)
    b5_p = pad2(params["b5"], 1, out_p).astype(jnp.float32)

    weights = (w1_p, b1_p, w2_p, b2_p, w3_p, b3_p, w4_p, b4_p, w5_p, b5_p)
    weight_bytes = sum(int(a.size) * a.dtype.itemsize for a in weights)

    # ---- VMEM budgeting -----------------------------------------------------
    budget = int(vmem_bytes * 0.75)
    if weight_bytes + _HEADROOM_BYTES > budget:
        # TODO(synk): tile the hidden dimension (extra grid axis / emit_pipeline)
        # when resident weights no longer fit (e.g. very large e_dim on v7x 64MiB).
        raise NotImplementedError("e_dim too large for resident-weight kernel")

    if single_buffer_weights is None:
        # Only worth touching pipeline_mode when double-buffered weights would
        # actually pressure VMEM; at small e_dim the default pipeline is fine.
        single_buffer_weights = (2 * weight_bytes) > int(0.25 * vmem_bytes)
    weight_buf = 1 if single_buffer_weights else 2
    resident_weight_bytes = weight_buf * weight_bytes

    # per-row VMEM: double-buffered x (bf16) + out (f32) tiles, plus a rough
    # allowance for the in-flight f32 (row, hid_p) activation temporaries.
    bytes_per_row = 2 * in_dim * 2 + 2 * out_p * 4 + 4 * hid_p * 4
    rows_cap = max(8, (budget - resident_weight_bytes - _HEADROOM_BYTES)
                   // bytes_per_row)

    # ---- batch tiling -------------------------------------------------------
    if batch_tile is not None:
        bm = batch_tile
    else:
        bm = _pick_batch_tile(B, num_tc, int(rows_cap))
    assert B % bm == 0, "batch must be divisible by the batch tile"
    grid = (B // bm,)

    # ---- right-sized scoped VMEM limit (never request all of v7x's 64 MiB) --
    need = resident_weight_bytes + bm * bytes_per_row + _HEADROOM_BYTES
    vmem_limit = int(min(max(need, 32 * _MIB), vmem_bytes * 0.9))

    x_b = x.astype(jnp.bfloat16)                       # half the x DMA bytes

    x_spec = pl.BlockSpec((bm, in_dim), lambda i: (i, 0))
    o_spec = pl.BlockSpec((bm, out_p), lambda i: (i, 0))

    def full(shape):
        # Whole weight/bias resident every step (constant index_map -> one DMA).
        if single_buffer_weights:
            return pl.BlockSpec(shape, lambda i: (0, 0),
                                pipeline_mode=pl.Buffered(buffer_count=1))
        return pl.BlockSpec(shape, lambda i: (0, 0))

    in_specs = [
        x_spec,
        full((in_dim, hid_p)),  full((1, hid_p)),
        full((hid_p, hid_p)),   full((1, hid_p)),
        full((hid_p, hid_p)),   full((1, hid_p)),
        full((hid_p, hid_p)),   full((1, hid_p)),
        full((hid_p, out_p)),   full((1, out_p)),
    ]

    flops = 2 * B * (in_dim * hid_p + 3 * hid_p * hid_p + hid_p * out_p)
    bytes_accessed = int(x_b.size) * 2 + weight_bytes + B * out_p * 4

    out_padded = pl.pallas_call(
        g_func_kernel,
        out_shape=jax.ShapeDtypeStruct((B, out_p), jnp.float32),
        grid_spec=pltpu.PrefetchScalarGridSpec(
            num_scalar_prefetch=0,
            grid=grid,
            in_specs=in_specs,
            out_specs=o_spec,
        ),
        compiler_params=pltpu.CompilerParams(
            dimension_semantics=("parallel",),
            vmem_limit_bytes=vmem_limit,
        ),
        cost_estimate=pl.CostEstimate(
            flops=flops, transcendentals=0, bytes_accessed=bytes_accessed),
    )(x_b, *weights)

    if return_padded:
        return out_padded          # caller slices [:, :out_dim]; skips one HBM pass
    return out_padded[:, :out_dim]


def init_params(key, in_dim, e_dim, out_dim):
    """PyTorch-Linear-style init; weights stored [in_features, out_features]."""
    in2 = 2 * in_dim
    dims = [(in2, e_dim), (e_dim, e_dim), (e_dim, e_dim), (e_dim, e_dim),
            (e_dim, out_dim)]
    params = {}
    for idx, (fan_in, fan_out) in enumerate(dims, start=1):
        key, kw, kb = jax.random.split(key, 3)
        bound = 1.0 / jnp.sqrt(jnp.float32(fan_in))
        params[f"w{idx}"] = jax.random.uniform(
            kw, (fan_in, fan_out), jnp.float32, minval=-bound, maxval=bound)
        params[f"b{idx}"] = jax.random.uniform(
            kb, (1, fan_out), jnp.float32, minval=-bound, maxval=bound)
    return params


def g_func_reference_f32(x, params):
    """Pure-JAX f32 reference of the original module forward."""
    z = jnp.concatenate([x, jnp.ones_like(x)], axis=1)
    h = z
    for i in range(1, 5):
        h = _leaky_relu(
            jnp.dot(h, params[f"w{i}"], precision=jax.lax.Precision.HIGHEST)
            + params[f"b{i}"])
    return jnp.dot(h, params["w5"],
                   precision=jax.lax.Precision.HIGHEST) + params["b5"]


def g_func_reference_kernel_math(x, params):
    """Pure-JAX reference mirroring the kernel math (f32 VPU layer 1, bf16 dots)."""
    in_dim = x.shape[1]
    w1 = params["w1"]
    w1_eff = w1[:in_dim, :]
    b1_eff = params["b1"] + jnp.sum(w1[in_dim:, :], axis=0, keepdims=True)

    xf = x.astype(jnp.bfloat16).astype(jnp.float32)
    h = b1_eff
    for k in range(in_dim):
        h = h + xf[:, k:k + 1] * w1_eff[k:k + 1, :]
    h = _leaky_relu(h)

    def lin(h, w, b):
        return jnp.dot(h.astype(jnp.bfloat16), w.astype(jnp.bfloat16),
                       preferred_element_type=jnp.float32) + b

    for i in range(2, 5):
        h = _leaky_relu(lin(h, params[f"w{i}"], params[f"b{i}"]))
    return lin(h, params["w5"], params["b5"])


if __name__ == "__main__":
    # Small synthetic shapes consistent with the module: x:[B, in_dim] -> [B, out_dim]
    batch, in_dim, e_dim, out_dim = 128, 2, 64, 2

    key = jax.random.PRNGKey(0)
    key, kx = jax.random.split(key)
    x = jax.random.normal(kx, (batch, in_dim), jnp.float32)
    params = init_params(key, in_dim, e_dim, out_dim)

    fwd = jax.jit(g_func_forward)      # 1 step on v5e/v6e, 2 steps on v7x
    out = jax.block_until_ready(fwd(x, params))

    assert out.shape == (batch, out_dim), out.shape

    ref_kernel = g_func_reference_kernel_math(x, params)
    ref_f32 = g_func_reference_f32(x, params)
    # Kernel-math reference should match up to MXU accumulation-order noise.
    assert jnp.allclose(out, ref_kernel, atol=1e-4, rtol=1e-4), \
        "mismatch vs kernel-math reference"
    # bf16 matmuls -> loosened tolerances vs. the pure f32 reference.
    assert jnp.allclose(out, ref_f32, atol=6e-2, rtol=6e-2), \
        "mismatch vs f32 reference"

    print("KERNEL_OK")
</pallas_src>

<mosaic_0001>
module attributes {stable_mosaic.version = 11 : i64} {
  func.func @g_func_kernel(%arg0: i32, %arg1: memref<128x2xbf16, #tpu.memory_space<vmem>>, %arg2: memref<2x128xf32, #tpu.memory_space<vmem>>, %arg3: memref<1x128xf32, #tpu.memory_space<vmem>>, %arg4: memref<128x128xbf16, #tpu.memory_space<vmem>>, %arg5: memref<1x128xf32, #tpu.memory_space<vmem>>, %arg6: memref<128x128xbf16, #tpu.memory_space<vmem>>, %arg7: memref<1x128xf32, #tpu.memory_space<vmem>>, %arg8: memref<128x128xbf16, #tpu.memory_space<vmem>>, %arg9: memref<1x128xf32, #tpu.memory_space<vmem>>, %arg10: memref<128x128xbf16, #tpu.memory_space<vmem>>, %arg11: memref<1x128xf32, #tpu.memory_space<vmem>>, %arg12: memref<128x128xf32, #tpu.memory_space<vmem>>) attributes {dimension_semantics = [#tpu.dimension_semantics<parallel>], iteration_bounds = array<i64: 1>, scalar_prefetch = 0 : i64, scratch_operands = 0 : i64, tpu.core_type = #tpu.core_type<tc>, window_params = [{transform_indices = @transform_0, window_bounds = array<i64: 128, 2>}, {pipeline_mode = #tpu.pipeline_mode<synchronous>, transform_indices = @transform_1, window_bounds = array<i64: 2, 128>}, {pipeline_mode = #tpu.pipeline_mode<synchronous>, transform_indices = @transform_2, window_bounds = array<i64: 1, 128>}, {pipeline_mode = #tpu.pipeline_mode<synchronous>, transform_indices = @transform_3, window_bounds = array<i64: 128, 128>}, {pipeline_mode = #tpu.pipeline_mode<synchronous>, transform_indices = @transform_4, window_bounds = array<i64: 1, 128>}, {pipeline_mode = #tpu.pipeline_mode<synchronous>, transform_indices = @transform_5, window_bounds = array<i64: 128, 128>}, {pipeline_mode = #tpu.pipeline_mode<synchronous>, transform_indices = @transform_6, window_bounds = array<i64: 1, 128>}, {pipeline_mode = #tpu.pipeline_mode<synchronous>, transform_indices = @transform_7, window_bounds = array<i64: 128, 128>}, {pipeline_mode = #tpu.pipeline_mode<synchronous>, transform_indices = @transform_8, window_bounds = array<i64: 1, 128>}, {pipeline_mode = #tpu.pipeline_mode<synchronous>, transform_indices = @transform_9, window_bounds = array<i64: 128, 128>}, {pipeline_mode = #tpu.pipeline_mode<synchronous>, transform_indices = @transform_10, window_bounds = array<i64: 1, 128>}, {transform_indices = @transform_11, window_bounds = array<i64: 128, 128>}]} {
    %c0 = arith.constant 0 : index
    %c0_0 = arith.constant 0 : index
    %0 = vector.load %arg1[%c0, %c0_0] : memref<128x2xbf16, #tpu.memory_space<vmem>>, vector<128x2xbf16>
    %1 = arith.extf %0 : vector<128x2xbf16> to vector<128x2xf32>
    %c0_1 = arith.constant 0 : index
    %c0_2 = arith.constant 0 : index
    %2 = vector.load %arg3[%c0_1, %c0_2] : memref<1x128xf32, #tpu.memory_space<vmem>>, vector<1x128xf32>
    %3 = vector.extract_strided_slice %1 {offsets = [0, 0], sizes = [128, 1], strides = [1, 1]} : vector<128x2xf32> to vector<128x1xf32>
    %c0_3 = arith.constant 0 : index
    %c0_4 = arith.constant 0 : index
    %4 = vector.load %arg2[%c0_3, %c0_4] : memref<2x128xf32, #tpu.memory_space<vmem>>, vector<1x128xf32>
    %5 = vector.broadcast %3 : vector<128x1xf32> to vector<128x128xf32>
    %6 = vector.broadcast %4 : vector<1x128xf32> to vector<128x128xf32>
    %7 = arith.mulf %5, %6 : vector<128x128xf32>
    %8 = vector.broadcast %2 : vector<1x128xf32> to vector<128x128xf32>
    %9 = arith.addf %8, %7 : vector<128x128xf32>
    %10 = vector.extract_strided_slice %1 {offsets = [0, 1], sizes = [128, 1], strides = [1, 1]} : vector<128x2xf32> to vector<128x1xf32>
    %c1 = arith.constant 1 : index
    %c0_5 = arith.constant 0 : index
    %11 = vector.load %arg2[%c1, %c0_5] : memref<2x128xf32, #tpu.memory_space<vmem>>, vector<1x128xf32>
    %12 = vector.broadcast %10 : vector<128x1xf32> to vector<128x128xf32>
    %13 = vector.broadcast %11 : vector<1x128xf32> to vector<128x128xf32>
    %14 = arith.mulf %12, %13 : vector<128x128xf32>
    %15 = arith.addf %9, %14 : vector<128x128xf32>
    %cst = arith.constant 0.00999999977 : f32
    %16 = vector.broadcast %cst : f32 to vector<128x128xf32>
    %17 = arith.mulf %16, %15 : vector<128x128xf32>
    %18 = arith.maximumf %15, %17 : vector<128x128xf32>
    %19 = arith.truncf %18 : vector<128x128xf32> to vector<128x128xbf16>
    %c0_6 = arith.constant 0 : index
    %c0_7 = arith.constant 0 : index
    %20 = vector.load %arg4[%c0_6, %c0_7] : memref<128x128xbf16, #tpu.memory_space<vmem>>, vector<128x128xbf16>
    %cst_8 = arith.constant dense<0.000000e+00> : vector<128x128xf32>
    %21 = tpu.matmul %19, %20, %cst_8 {dimension_numbers = #tpu.dot_dimension_numbers<[1], [0], [0], [1], [0, 0, 1, 1], [], []>} : vector<128x128xbf16>, vector<128x128xbf16>, vector<128x128xf32> -> vector<128x128xf32>
    %c0_9 = arith.constant 0 : index
    %c0_10 = arith.constant 0 : index
    %22 = vector.load %arg5[%c0_9, %c0_10] : memref<1x128xf32, #tpu.memory_space<vmem>>, vector<1x128xf32>
    %23 = vector.broadcast %22 : vector<1x128xf32> to vector<128x128xf32>
    %24 = arith.addf %21, %23 : vector<128x128xf32>
    %cst_11 = arith.constant 0.00999999977 : f32
    %25 = vector.broadcast %cst_11 : f32 to vector<128x128xf32>
    %26 = arith.mulf %25, %24 : vector<128x128xf32>
    %27 = arith.maximumf %24, %26 : vector<128x128xf32>
    %28 = arith.truncf %27 : vector<128x128xf32> to vector<128x128xbf16>
    %c0_12 = arith.constant 0 : index
    %c0_13 = arith.constant 0 : index
    %29 = vector.load %arg6[%c0_12, %c0_13] : memref<128x128xbf16, #tpu.memory_space<vmem>>, vector<128x128xbf16>
    %cst_14 = arith.constant dense<0.000000e+00> : vector<128x128xf32>
    %30 = tpu.matmul %28, %29, %cst_14 {dimension_numbers = #tpu.dot_dimension_numbers<[1], [0], [0], [1], [0, 0, 1, 1], [], []>} : vector<128x128xbf16>, vector<128x128xbf16>, vector<128x128xf32> -> vector<128x128xf32>
    %c0_15 = arith.constant 0 : index
    %c0_16 = arith.constant 0 : index
    %31 = vector.load %arg7[%c0_15, %c0_16] : memref<1x128xf32, #tpu.memory_space<vmem>>, vector<1x128xf32>
    %32 = vector.broadcast %31 : vector<1x128xf32> to vector<128x128xf32>
    %33 = arith.addf %30, %32 : vector<128x128xf32>
    %cst_17 = arith.constant 0.00999999977 : f32
    %34 = vector.broadcast %cst_17 : f32 to vector<128x128xf32>
    %35 = arith.mulf %34, %33 : vector<128x128xf32>
    %36 = arith.maximumf %33, %35 : vector<128x128xf32>
    %37 = arith.truncf %36 : vector<128x128xf32> to vector<128x128xbf16>
    %c0_18 = arith.constant 0 : index
    %c0_19 = arith.constant 0 : index
    %38 = vector.load %arg8[%c0_18, %c0_19] : memref<128x128xbf16, #tpu.memory_space<vmem>>, vector<128x128xbf16>
    %cst_20 = arith.constant dense<0.000000e+00> : vector<128x128xf32>
    %39 = tpu.matmul %37, %38, %cst_20 {dimension_numbers = #tpu.dot_dimension_numbers<[1], [0], [0], [1], [0, 0, 1, 1], [], []>} : vector<128x128xbf16>, vector<128x128xbf16>, vector<128x128xf32> -> vector<128x128xf32>
    %c0_21 = arith.constant 0 : index
    %c0_22 = arith.constant 0 : index
    %40 = vector.load %arg9[%c0_21, %c0_22] : memref<1x128xf32, #tpu.memory_space<vmem>>, vector<1x128xf32>
    %41 = vector.broadcast %40 : vector<1x128xf32> to vector<128x128xf32>
    %42 = arith.addf %39, %41 : vector<128x128xf32>
    %cst_23 = arith.constant 0.00999999977 : f32
    %43 = vector.broadcast %cst_23 : f32 to vector<128x128xf32>
    %44 = arith.mulf %43, %42 : vector<128x128xf32>
    %45 = arith.maximumf %42, %44 : vector<128x128xf32>
    %46 = arith.truncf %45 : vector<128x128xf32> to vector<128x128xbf16>
    %c0_24 = arith.constant 0 : index
    %c0_25 = arith.constant 0 : index
    %47 = vector.load %arg10[%c0_24, %c0_25] : memref<128x128xbf16, #tpu.memory_space<vmem>>, vector<128x128xbf16>
    %cst_26 = arith.constant dense<0.000000e+00> : vector<128x128xf32>
    %48 = tpu.matmul %46, %47, %cst_26 {dimension_numbers = #tpu.dot_dimension_numbers<[1], [0], [0], [1], [0, 0, 1, 1], [], []>} : vector<128x128xbf16>, vector<128x128xbf16>, vector<128x128xf32> -> vector<128x128xf32>
    %c0_27 = arith.constant 0 : index
    %c0_28 = arith.constant 0 : index
    %49 = vector.load %arg11[%c0_27, %c0_28] : memref<1x128xf32, #tpu.memory_space<vmem>>, vector<1x128xf32>
    %50 = vector.broadcast %49 : vector<1x128xf32> to vector<128x128xf32>
    %51 = arith.addf %48, %50 : vector<128x128xf32>
    %c0_29 = arith.constant 0 : index
    %c0_30 = arith.constant 0 : index
    %52 = vector.load %arg12[%c0_29, %c0_30] : memref<128x128xf32, #tpu.memory_space<vmem>>, vector<128x128xf32>
    tpu.vector_store %arg12[%c0_29, %c0_30], %51 {strides = array<i32>} : memref<128x128xf32, #tpu.memory_space<vmem>>, vector<128x128xf32>,
    return
  }
  func.func @transform_0(%arg0: i32) -> (i32, i32) {
    %c0_i32 = arith.constant 0 : i32
    %c0_i32_0 = arith.constant 0 : i32
    return %arg0, %c0_i32 : i32, i32
  }
  func.func @transform_1(%arg0: i32) -> (i32, i32) {
    %c0_i32 = arith.constant 0 : i32
    %c0_i32_0 = arith.constant 0 : i32
    %c0_i32_1 = arith.constant 0 : i32
    return %c0_i32, %c0_i32_0 : i32, i32
  }
  func.func @transform_2(%arg0: i32) -> (i32, i32) {
    %c0_i32 = arith.constant 0 : i32
    %c0_i32_0 = arith.constant 0 : i32
    %c0_i32_1 = arith.constant 0 : i32
    return %c0_i32, %c0_i32_0 : i32, i32
  }
  func.func @transform_3(%arg0: i32) -> (i32, i32) {
    %c0_i32 = arith.constant 0 : i32
    %c0_i32_0 = arith.constant 0 : i32
    %c0_i32_1 = arith.constant 0 : i32
    return %c0_i32, %c0_i32_0 : i32, i32
  }
  func.func @transform_4(%arg0: i32) -> (i32, i32) {
    %c0_i32 = arith.constant 0 : i32
    %c0_i32_0 = arith.constant 0 : i32
    %c0_i32_1 = arith.constant 0 : i32
    return %c0_i32, %c0_i32_0 : i32, i32
  }
  func.func @transform_5(%arg0: i32) -> (i32, i32) {
    %c0_i32 = arith.constant 0 : i32
    %c0_i32_0 = arith.constant 0 : i32
    %c0_i32_1 = arith.constant 0 : i32
    return %c0_i32, %c0_i32_0 : i32, i32
  }
  func.func @transform_6(%arg0: i32) -> (i32, i32) {
    %c0_i32 = arith.constant 0 : i32
    %c0_i32_0 = arith.constant 0 : i32
    %c0_i32_1 = arith.constant 0 : i32
    return %c0_i32, %c0_i32_0 : i32, i32
  }
  func.func @transform_7(%arg0: i32) -> (i32, i32) {
    %c0_i32 = arith.constant 0 : i32
    %c0_i32_0 = arith.constant 0 : i32
    %c0_i32_1 = arith.constant 0 : i32
    return %c0_i32, %c0_i32_0 : i32, i32
  }
  func.func @transform_8(%arg0: i32) -> (i32, i32) {
    %c0_i32 = arith.constant 0 : i32
    %c0_i32_0 = arith.constant 0 : i32
    %c0_i32_1 = arith.constant 0 : i32
    return %c0_i32, %c0_i32_0 : i32, i32
  }
  func.func @transform_9(%arg0: i32) -> (i32, i32) {
    %c0_i32 = arith.constant 0 : i32
    %c0_i32_0 = arith.constant 0 : i32
    %c0_i32_1 = arith.constant 0 : i32
    return %c0_i32, %c0_i32_0 : i32, i32
  }
  func.func @transform_10(%arg0: i32) -> (i32, i32) {
    %c0_i32 = arith.constant 0 : i32
    %c0_i32_0 = arith.constant 0 : i32
    %c0_i32_1 = arith.constant 0 : i32
    return %c0_i32, %c0_i32_0 : i32, i32
  }
  func.func @transform_11(%arg0: i32) -> (i32, i32) {
    %c0_i32 = arith.constant 0 : i32
    %c0_i32_0 = arith.constant 0 : i32
    return %arg0, %c0_i32 : i32, i32
  }
}

</mosaic_0001>

<llo_original>
// kernel: g_func_forward.1
$region0: #{g_func_forward.1}
  #allocation0 [shape = 'u32[]', space=smem, size = 0x4, offset = 0x4, fixed_abs, tag = 'smem constant byte address 0x4 - core index']
  #allocation1 [shape = 'u32[144,128]{1,0:T(1,128)}', space=vmem, size = 0x12000, scoped, tag = 'internal scratch']
  %s0 = inlined_call_operand.vmem [shape: bf16[128,2], index: 0, kind: input, shape index: {}]
  %s1 = inlined_call_operand.vmem [shape: f32[2,128], index: 1, kind: input, shape index: {}]
  %s2 = inlined_call_operand.vmem [shape: f32[1,128], index: 2, kind: input, shape index: {}]
  %s3 = inlined_call_operand.vmem [shape: bf16[128,128], index: 3, kind: input, shape index: {}]
  %s4 = inlined_call_operand.vmem [shape: f32[1,128], index: 4, kind: input, shape index: {}]
  %s5 = inlined_call_operand.vmem [shape: bf16[128,128], index: 5, kind: input, shape index: {}]
  %s6 = inlined_call_operand.vmem [shape: f32[1,128], index: 6, kind: input, shape index: {}]
  %s7 = inlined_call_operand.vmem [shape: bf16[128,128], index: 7, kind: input, shape index: {}]
  %s8 = inlined_call_operand.vmem [shape: f32[1,128], index: 8, kind: input, shape index: {}]
  %s9 = inlined_call_operand.vmem [shape: bf16[128,128], index: 9, kind: input, shape index: {}]
  %s10 = inlined_call_operand.vmem [shape: f32[1,128], index: 10, kind: input, shape index: {}]
  %s11 = inlined_call_operand.vmem [shape: f32[128,128], index: 11, kind: output, shape index: {}]
  %s12 = sld [smem:[#allocation0]]
  $region54: #{g_func_forward.1} parent=0
    _
  %s14 = ssub.s32 1, %s12
  %s15 = scalar_select 0, %s14, %s12
  // Predicated region
  $region2: #{g_func_forward.1} parent=0 // pred_check
    _
  $region3: #{g_func_forward.1} parent=0 // pred_check_branch
    %17 = sbr.rel (0) target = $region5
  $region4: #{g_func_forward.1} parent=0 // pred_region
    _
  $region5: #{g_func_forward.1} parent=0 // pred_fallthru
    _
  // Predicated region
  $region6: #{g_func_forward.1} parent=0 // pred_check
    _
  $region7: #{g_func_forward.1} parent=0 // pred_check_branch
    %19 = sbr.rel (0) target = $region9
  $region8: #{g_func_forward.1} parent=0 // pred_region
    _
  $region9: #{g_func_forward.1} parent=0 // pred_fallthru
    _
  // Predicated region
  $region10: #{g_func_forward.1} parent=0 // pred_check
    _
  $region11: #{g_func_forward.1} parent=0 // pred_check_branch
    %21 = sbr.rel (0) target = $region13
  $region12: #{g_func_forward.1} parent=0 // pred_region
    _
  $region13: #{g_func_forward.1} parent=0 // pred_fallthru
    _
  // Predicated region
  $region14: #{g_func_forward.1} parent=0 // pred_check
    _
  $region15: #{g_func_forward.1} parent=0 // pred_check_branch
    %23 = sbr.rel (0) target = $region17
  $region16: #{g_func_forward.1} parent=0 // pred_region
    _
  $region17: #{g_func_forward.1} parent=0 // pred_fallthru
    _
  // Predicated region
  $region18: #{g_func_forward.1} parent=0 // pred_check
    _
  $region19: #{g_func_forward.1} parent=0 // pred_check_branch
    %25 = sbr.rel (0) target = $region21
  $region20: #{g_func_forward.1} parent=0 // pred_region
    _
  $region21: #{g_func_forward.1} parent=0 // pred_fallthru
    _
  // Predicated region
  $region22: #{g_func_forward.1} parent=0 // pred_check
    _
  $region23: #{g_func_forward.1} parent=0 // pred_check_branch
    %27 = sbr.rel (0) target = $region25
  $region24: #{g_func_forward.1} parent=0 // pred_region
    _
  $region25: #{g_func_forward.1} parent=0 // pred_fallthru
    _
  // Predicated region
  $region26: #{g_func_forward.1} parent=0 // pred_check
    _
  $region27: #{g_func_forward.1} parent=0 // pred_check_branch
    %29 = sbr.rel (0) target = $region29
  $region28: #{g_func_forward.1} parent=0 // pred_region
    _
  $region29: #{g_func_forward.1} parent=0 // pred_fallthru
    _
  // Predicated region
  $region30: #{g_func_forward.1} parent=0 // pred_check
    _
  $region31: #{g_func_forward.1} parent=0 // pred_check_branch
    %31 = sbr.rel (0) target = $region33
  $region32: #{g_func_forward.1} parent=0 // pred_region
    _
  $region33: #{g_func_forward.1} parent=0 // pred_fallthru
    _
  // Predicated region
  $region34: #{g_func_forward.1} parent=0 // pred_check
    _
  $region35: #{g_func_forward.1} parent=0 // pred_check_branch
    %33 = sbr.rel (0) target = $region37
  $region36: #{g_func_forward.1} parent=0 // pred_region
    _
  $region37: #{g_func_forward.1} parent=0 // pred_fallthru
    _
  // Predicated region
  $region38: #{g_func_forward.1} parent=0 // pred_check
    _
  $region39: #{g_func_forward.1} parent=0 // pred_check_branch
    %35 = sbr.rel (0) target = $region41
  $region40: #{g_func_forward.1} parent=0 // pred_region
    _
  $region41: #{g_func_forward.1} parent=0 // pred_fallthru
    _
  // Predicated region
  $region42: #{g_func_forward.1} parent=0 // pred_check
    _
  $region43: #{g_func_forward.1} parent=0 // pred_check_branch
    %37 = sbr.rel (0) target = $region45
  $region44: #{g_func_forward.1} parent=0 // pred_region
    _
  $region45: #{g_func_forward.1} parent=0 // pred_fallthru
    _
  %v39 = vld [vmem:[%s0] sm:$0xf]
  %v40 = vld [vmem:[%s0 + $0x4] sm:$0xf]
  %v41 = vld [vmem:[%s0 + $0x8] sm:$0xf]
  %v42 = vld [vmem:[%s0 + $0xc] sm:$0xf]
  %v43 = vld [vmem:[%s0 + $0x10] sm:$0xf]
  %v44 = vld [vmem:[%s0 + $0x14] sm:$0xf]
  %v45 = vld [vmem:[%s0 + $0x18] sm:$0xf]
  %v46 = vld [vmem:[%s0 + $0x1c] sm:$0xf]
  %v47 = vld [vmem:[%s0 + $0x20] sm:$0xf]
  %v48 = vld [vmem:[%s0 + $0x24] sm:$0xf]
  %v49 = vld [vmem:[%s0 + $0x28] sm:$0xf]
  %v50 = vld [vmem:[%s0 + $0x2c] sm:$0xf]
  %v51 = vld [vmem:[%s0 + $0x30] sm:$0xf]
  %v52 = vld [vmem:[%s0 + $0x34] sm:$0xf]
  %v53 = vld [vmem:[%s0 + $0x38] sm:$0xf]
  %v54 = vld [vmem:[%s0 + $0x3c] sm:$0xf]
  %v55 = vunpack.c.l.bf16 %v39
  %v56 = vunpack.c.l.bf16 %v40
  %v57 = vunpack.c.l.bf16 %v41
  %v58 = vunpack.c.l.bf16 %v42
  %v59 = vunpack.c.l.bf16 %v43
  %v60 = vunpack.c.l.bf16 %v44
  %v61 = vunpack.c.l.bf16 %v45
  %v62 = vunpack.c.l.bf16 %v46
  %v63 = vunpack.c.l.bf16 %v47
  %v64 = vunpack.c.l.bf16 %v48
  %v65 = vunpack.c.l.bf16 %v49
  %v66 = vunpack.c.l.bf16 %v50
  %v67 = vunpack.c.l.bf16 %v51
  %v68 = vunpack.c.l.bf16 %v52
  %v69 = vunpack.c.l.bf16 %v53
  %v70 = vunpack.c.l.bf16 %v54
  %v71 = vld [vmem:[%s2] sm:$0x1]
  %v72 = vld [vmem:[%s1] sm:$0x1]
  %74 = vset.pattern.permute.xlu0 0
  %75 = vperm.xlu0 %74, %v55
  %v76 = vpop.permute.xlu0 %75
  %79 = vset.pattern.permute.xlu0 0
  %80 = vperm.xlu0 %79, %v56
  %v81 = vpop.permute.xlu0 %80
  %84 = vset.pattern.permute.xlu0 0
  %85 = vperm.xlu0 %84, %v57
  %v86 = vpop.permute.xlu0 %85
  %89 = vset.pattern.permute.xlu0 0
  %90 = vperm.xlu0 %89, %v58
  %v91 = vpop.permute.xlu0 %90
  %94 = vset.pattern.permute.xlu0 0
  %95 = vperm.xlu0 %94, %v59
  %v96 = vpop.permute.xlu0 %95
  %99 = vset.pattern.permute.xlu0 0
  %100 = vperm.xlu0 %99, %v60
  %v101 = vpop.permute.xlu0 %100
  %104 = vset.pattern.permute.xlu0 0
  %105 = vperm.xlu0 %104, %v61
  %v106 = vpop.permute.xlu0 %105
  %109 = vset.pattern.permute.xlu0 0
  %110 = vperm.xlu0 %109, %v62
  %v111 = vpop.permute.xlu0 %110
  %114 = vset.pattern.permute.xlu0 0
  %115 = vperm.xlu0 %114, %v63
  %v116 = vpop.permute.xlu0 %115
  %119 = vset.pattern.permute.xlu0 0
  %120 = vperm.xlu0 %119, %v64
  %v121 = vpop.permute.xlu0 %120
  %124 = vset.pattern.permute.xlu0 0
  %125 = vperm.xlu0 %124, %v65
  %v126 = vpop.permute.xlu0 %125
  %129 = vset.pattern.permute.xlu0 0
  %130 = vperm.xlu0 %129, %v66
  %v131 = vpop.permute.xlu0 %130
  %134 = vset.pattern.permute.xlu0 0
  %135 = vperm.xlu0 %134, %v67
  %v136 = vpop.permute.xlu0 %135
  %139 = vset.pattern.permute.xlu0 0
  %140 = vperm.xlu0 %139, %v68
  %v141 = vpop.permute.xlu0 %140
  %144 = vset.pattern.permute.xlu0 0
  %145 = vperm.xlu0 %144, %v69
  %v146 = vpop.permute.xlu0 %145
  %149 = vset.pattern.permute.xlu0 0
  %150 = vperm.xlu0 %149, %v70
  %v151 = vpop.permute.xlu0 %150
  %v153 = vlaneseq
  %v154 = vshrl.u32 %v153, 7
  %v155 = vsub.s32 0, %v154
  %v156 = vrot.slane %v72, %v155
  %v157 = vmul.f32 %v76, %v156
  %v158 = vmul.f32 %v81, %v156
  %v159 = vmul.f32 %v86, %v156
  %v160 = vmul.f32 %v91, %v156
  %v161 = vmul.f32 %v96, %v156
  %v162 = vmul.f32 %v101, %v156
  %v163 = vmul.f32 %v106, %v156
  %v164 = vmul.f32 %v111, %v156
  %v165 = vmul.f32 %v116, %v156
  %v166 = vmul.f32 %v121, %v156
  %v167 = vmul.f32 %v126, %v156
  %v168 = vmul.f32 %v131, %v156
  %v169 = vmul.f32 %v136, %v156
  %v170 = vmul.f32 %v141, %v156
  %v171 = vmul.f32 %v146, %v156
  %v172 = vmul.f32 %v151, %v156
  %v174 = vlaneseq
  %v175 = vshrl.u32 %v174, 7
  %v176 = vsub.s32 0, %v175
  %v177 = vrot.slane %v71, %v176
  %v179 = vadd.f32 %v177, %v157
  %v180 = vadd.f32 %v177, %v158
  %v181 = vadd.f32 %v177, %v159
  %v182 = vadd.f32 %v177, %v160
  %v183 = vadd.f32 %v177, %v161
  %v184 = vadd.f32 %v177, %v162
  %v185 = vadd.f32 %v177, %v163
  %v186 = vadd.f32 %v177, %v164
  %v187 = vadd.f32 %v177, %v165
  %v188 = vadd.f32 %v177, %v166
  %v189 = vadd.f32 %v177, %v167
  %v190 = vadd.f32 %v177, %v168
  %v191 = vadd.f32 %v177, %v169
  %v192 = vadd.f32 %v177, %v170
  %v193 = vadd.f32 %v177, %v171
  %v194 = vadd.f32 %v177, %v172
  %v195 = vld [vmem:[%s1 + $0x1] sm:$0x1]
  %196 = vset.pattern.permute.xlu0 1
  %197 = vperm.xlu0 %196, %v55
  %v198 = vpop.permute.xlu0 %197
  %200 = vset.pattern.permute.xlu0 1
  %201 = vperm.xlu0 %200, %v56
  %v202 = vpop.permute.xlu0 %201
  %204 = vset.pattern.permute.xlu0 1
  %205 = vperm.xlu0 %204, %v57
  %v206 = vpop.permute.xlu0 %205
  %208 = vset.pattern.permute.xlu0 1
  %209 = vperm.xlu0 %208, %v58
  %v210 = vpop.permute.xlu0 %209
  %212 = vset.pattern.permute.xlu0 1
  %213 = vperm.xlu0 %212, %v59
  %v214 = vpop.permute.xlu0 %213
  %216 = vset.pattern.permute.xlu0 1
  %217 = vperm.xlu0 %216, %v60
  %v218 = vpop.permute.xlu0 %217
  %220 = vset.pattern.permute.xlu0 1
  %221 = vperm.xlu0 %220, %v61
  %v222 = vpop.permute.xlu0 %221
  %224 = vset.pattern.permute.xlu0 1
  %225 = vperm.xlu0 %224, %v62
  %v226 = vpop.permute.xlu0 %225
  %228 = vset.pattern.permute.xlu0 1
  %229 = vperm.xlu0 %228, %v63
  %v230 = vpop.permute.xlu0 %229
  %232 = vset.pattern.permute.xlu0 1
  %233 = vperm.xlu0 %232, %v64
  %v234 = vpop.permute.xlu0 %233
  %236 = vset.pattern.permute.xlu0 1
  %237 = vperm.xlu0 %236, %v65
  %v238 = vpop.permute.xlu0 %237
  %240 = vset.pattern.permute.xlu0 1
  %241 = vperm.xlu0 %240, %v66
  %v242 = vpop.permute.xlu0 %241
  %244 = vset.pattern.permute.xlu0 1
  %245 = vperm.xlu0 %244, %v67
  %v246 = vpop.permute.xlu0 %245
  %248 = vset.pattern.permute.xlu0 1
  %249 = vperm.xlu0 %248, %v68
  %v250 = vpop.permute.xlu0 %249
  %252 = vset.pattern.permute.xlu0 1
  %253 = vperm.xlu0 %252, %v69
  %v254 = vpop.permute.xlu0 %253
  %256 = vset.pattern.permute.xlu0 1
  %257 = vperm.xlu0 %256, %v70
  %v258 = vpop.permute.xlu0 %257
  %v260 = vlaneseq
  %v261 = vshrl.u32 %v260, 7
  %v262 = vsub.s32 0, %v261
  %v263 = vrot.slane %v195, %v262
  %v264 = vmul.f32 %v198, %v263
  %v265 = vmul.f32 %v202, %v263
  %v266 = vmul.f32 %v206, %v263
  %v267 = vmul.f32 %v210, %v263
  %v268 = vmul.f32 %v214, %v263
  %v269 = vmul.f32 %v218, %v263
  %v270 = vmul.f32 %v222, %v263
  %v271 = vmul.f32 %v226, %v263
  %v272 = vmul.f32 %v230, %v263
  %v273 = vmul.f32 %v234, %v263
  %v274 = vmul.f32 %v238, %v263
  %v275 = vmul.f32 %v242, %v263
  %v276 = vmul.f32 %v246, %v263
  %v277 = vmul.f32 %v250, %v263
  %v278 = vmul.f32 %v254, %v263
  %v279 = vmul.f32 %v258, %v263
  %v280 = vadd.f32 %v179, %v264
  %v281 = vadd.f32 %v180, %v265
  %v282 = vadd.f32 %v181, %v266
  %v283 = vadd.f32 %v182, %v267
  %v284 = vadd.f32 %v183, %v268
  %v285 = vadd.f32 %v184, %v269
  %v286 = vadd.f32 %v185, %v270
  %v287 = vadd.f32 %v186, %v271
  %v288 = vadd.f32 %v187, %v272
  %v289 = vadd.f32 %v188, %v273
  %v290 = vadd.f32 %v189, %v274
  %v291 = vadd.f32 %v190, %v275
  %v292 = vadd.f32 %v191, %v276
  %v293 = vadd.f32 %v192, %v277
  %v294 = vadd.f32 %v193, %v278
  %v295 = vadd.f32 %v194, %v279
  %v296 = vmul.f32 %v280, 0.01
  %v297 = vmul.f32 %v281, 0.01
  %v298 = vmul.f32 %v282, 0.01
  %v299 = vmul.f32 %v283, 0.01
  %v300 = vmul.f32 %v284, 0.01
  %v301 = vmul.f32 %v285, 0.01
  %v302 = vmul.f32 %v286, 0.01
  %v303 = vmul.f32 %v287, 0.01
  %v304 = vmul.f32 %v288, 0.01
  %v305 = vmul.f32 %v289, 0.01
  %v306 = vmul.f32 %v290, 0.01
  %v307 = vmul.f32 %v291, 0.01
  %v308 = vmul.f32 %v292, 0.01
  %v309 = vmul.f32 %v293, 0.01
  %v310 = vmul.f32 %v294, 0.01
  %v311 = vmul.f32 %v295, 0.01
  %v312 = vmax.f32 %v280, %v296
  %v313 = vmax.f32 %v281, %v297
  %v314 = vmax.f32 %v282, %v298
  %v315 = vmax.f32 %v283, %v299
  %v316 = vmax.f32 %v284, %v300
  %v317 = vmax.f32 %v285, %v301
  %v318 = vmax.f32 %v286, %v302
  %v319 = vmax.f32 %v287, %v303
  %v320 = vmax.f32 %v288, %v304
  %v321 = vmax.f32 %v289, %v305
  %v322 = vmax.f32 %v290, %v306
  %v323 = vmax.f32 %v291, %v307
  %v324 = vmax.f32 %v292, %v308
  %v325 = vmax.f32 %v293, %v309
  %v326 = vmax.f32 %v294, %v310
  %v327 = vmax.f32 %v295, %v311
  %v328 = vpack.c.bf16 %v313, %v312
  %v329 = vpack.c.bf16 %v315, %v314
  %v330 = vpack.c.bf16 %v317, %v316
  %v331 = vpack.c.bf16 %v319, %v318
  %v332 = vpack.c.bf16 %v321, %v320
  %v333 = vpack.c.bf16 %v323, %v322
  %v334 = vpack.c.bf16 %v325, %v324
  %v335 = vpack.c.bf16 %v327, %v326
  %v336 = vld [vmem:[%s3] sm:$0xf]
  %v337 = vld [vmem:[%s3 + $0x4] sm:$0xf]
  %v338 = vld [vmem:[%s3 + $0x8] sm:$0xf]
  %v339 = vld [vmem:[%s3 + $0xc] sm:$0xf]
  %v340 = vld [vmem:[%s3 + $0x10] sm:$0xf]
  %v341 = vld [vmem:[%s3 + $0x14] sm:$0xf]
  %v342 = vld [vmem:[%s3 + $0x18] sm:$0xf]
  %v343 = vld [vmem:[%s3 + $0x1c] sm:$0xf]
  %v344 = vld [vmem:[%s3 + $0x20] sm:$0xf]
  %v345 = vld [vmem:[%s3 + $0x24] sm:$0xf]
  %v346 = vld [vmem:[%s3 + $0x28] sm:$0xf]
  %v347 = vld [vmem:[%s3 + $0x2c] sm:$0xf]
  %v348 = vld [vmem:[%s3 + $0x30] sm:$0xf]
  %v349 = vld [vmem:[%s3 + $0x34] sm:$0xf]
  %v350 = vld [vmem:[%s3 + $0x38] sm:$0xf]
  %v351 = vld [vmem:[%s3 + $0x3c] sm:$0xf]
  %v352 = vld [vmem:[%s4] sm:$0x1]
  %v354 = vlaneseq
  %v355 = vshrl.u32 %v354, 7
  %v356 = vsub.s32 0, %v355
  %v357 = vrot.slane %v352, %v356
  %v375 = vunpack.c.l.b16 %v336
  %v376 = vunpack.c.l.b16 %v337
  %v377 = vunpack.c.l.b16 %v338
  %v378 = vunpack.c.l.b16 %v339
  %v379 = vunpack.c.l.b16 %v340
  %v380 = vunpack.c.l.b16 %v341
  %v381 = vunpack.c.l.b16 %v342
  %v382 = vunpack.c.l.b16 %v343
  %v383 = vunpack.c.l.b16 %v344
  %v384 = vunpack.c.l.b16 %v345
  %v385 = vunpack.c.l.b16 %v346
  %v386 = vunpack.c.l.b16 %v347
  %v387 = vunpack.c.l.b16 %v348
  %v388 = vunpack.c.l.b16 %v349
  %v389 = vunpack.c.l.b16 %v350
  %v390 = vunpack.c.l.b16 %v351
  %v391 = vpack.c.b16 %v376, %v375
  %v392 = vpack.c.b16 %v378, %v377
  %v393 = vpack.c.b16 %v380, %v379
  %v394 = vpack.c.b16 %v382, %v381
  %v395 = vpack.c.b16 %v384, %v383
  %v396 = vpack.c.b16 %v386, %v385
  %v397 = vpack.c.b16 %v388, %v387
  %v398 = vpack.c.b16 %v390, %v389
  %407 = vmatprep.subr.bf16.mxu0 0
  %408 = vmatpush1.bf16.msra.mxu0 %v391
  %409 = vmatprep.subr.bf16.mxu0 0
  %410 = vmatpush1.bf16.msra.mxu0 %v392
  %411 = vmatprep.subr.bf16.mxu0 0
  %412 = vmatpush1.bf16.msra.mxu0 %v393
  %413 = vmatprep.subr.bf16.mxu0 0
  %414 = vmatpush1.bf16.msra.mxu0 %v394
  %415 = vmatprep.subr.bf16.mxu0 0
  %416 = vmatpush1.bf16.msra.mxu0 %v395
  %417 = vmatprep.subr.bf16.mxu0 0
  %418 = vmatpush1.bf16.msra.mxu0 %v396
  %419 = vmatprep.subr.bf16.mxu0 0
  %420 = vmatpush1.bf16.msra.mxu0 %v397
  %421 = vmatprep.subr.bf16.mxu0 0
  %422 = vmatpush1.bf16.msra.mxu0 %v398
  %423 = vmatprep.subr.bf16.mxu0 0
  %424 = vmatpush1.bf16.msra.mxu0 0
  %425 = vmatprep.subr.bf16.mxu0 0
  %426 = vmatpush1.bf16.msra.mxu0 0
  %427 = vmatprep.subr.bf16.mxu0 0
  %428 = vmatpush1.bf16.msra.mxu0 0
  %429 = vmatprep.subr.bf16.mxu0 0
  %430 = vmatpush1.bf16.msra.mxu0 0
  %431 = vmatprep.subr.bf16.mxu0 0
  %432 = vmatpush1.bf16.msra.mxu0 0
  %433 = vmatprep.subr.bf16.mxu0 0
  %434 = vmatpush1.bf16.msra.mxu0 0
  %435 = vmatprep.subr.bf16.mxu0 0
  %436 = vmatpush1.bf16.msra.mxu0 0
  %437 = vmatprep.subr.bf16.mxu0 0
  %438 = vmatpush1.bf16.msra.mxu0 0
  %439 = vmatprep.mubr.bf16.mxu0 0
  %440 = vmatmul.mubr.bf16.gmra.mrb[0].mxu0 %v328
  %v441 = vpop.f32.mrb[0].mxu0
  %v442 = vadd.f32 %v357, %v441
  %v443 = vpop.f32.mrb[0].mxu0
  %v444 = vpop.f32.mrb[0].mxu0
  %v445 = vadd.f32 %v357, %v444
  %v446 = vpop.f32.mrb[0].mxu0
  %447 = vmatprep.mubr.bf16.mxu0 0
  %448 = vmatmul.mubr.bf16.gmra.mrb[0].mxu0 %v329
  %v449 = vpop.f32.mrb[0].mxu0
  %v450 = vadd.f32 %v357, %v449
  %v451 = vpop.f32.mrb[0].mxu0
  %v452 = vpop.f32.mrb[0].mxu0
  %v453 = vadd.f32 %v357, %v452
  %v454 = vpop.f32.mrb[0].mxu0
  %455 = vmatprep.mubr.bf16.mxu0 0
  %456 = vmatmul.mubr.bf16.gmra.mrb[0].mxu0 %v330
  %v457 = vpop.f32.mrb[0].mxu0
  %v458 = vadd.f32 %v357, %v457
  %v459 = vpop.f32.mrb[0].mxu0
  %v460 = vpop.f32.mrb[0].mxu0
  %v461 = vadd.f32 %v357, %v460
  %v462 = vpop.f32.mrb[0].mxu0
  %463 = vmatprep.mubr.bf16.mxu0 0
  %464 = vmatmul.mubr.bf16.gmra.mrb[0].mxu0 %v331
  %v465 = vpop.f32.mrb[0].mxu0
  %v466 = vadd.f32 %v357, %v465
  %v467 = vpop.f32.mrb[0].mxu0
  %v468 = vpop.f32.mrb[0].mxu0
  %v469 = vadd.f32 %v357, %v468
  %v470 = vpop.f32.mrb[0].mxu0
  %471 = vmatprep.mubr.bf16.mxu0 0
  %472 = vmatmul.mubr.bf16.gmra.mrb[0].mxu0 %v332
  %v473 = vpop.f32.mrb[0].mxu0
  %v474 = vadd.f32 %v357, %v473
  %v475 = vpop.f32.mrb[0].mxu0
  %v476 = vpop.f32.mrb[0].mxu0
  %v477 = vadd.f32 %v357, %v476
  %v478 = vpop.f32.mrb[0].mxu0
  %479 = vmatprep.mubr.bf16.mxu0 0
  %480 = vmatmul.mubr.bf16.gmra.mrb[0].mxu0 %v333
  %v481 = vpop.f32.mrb[0].mxu0
  %v482 = vadd.f32 %v357, %v481
  %v483 = vpop.f32.mrb[0].mxu0
  %v484 = vpop.f32.mrb[0].mxu0
  %v485 = vadd.f32 %v357, %v484
  %v486 = vpop.f32.mrb[0].mxu0
  %487 = vmatprep.mubr.bf16.mxu0 0
  %488 = vmatmul.mubr.bf16.gmra.mrb[0].mxu0 %v334
  %v489 = vpop.f32.mrb[0].mxu0
  %v490 = vadd.f32 %v357, %v489
  %v491 = vpop.f32.mrb[0].mxu0
  %v492 = vpop.f32.mrb[0].mxu0
  %v493 = vadd.f32 %v357, %v492
  %v494 = vpop.f32.mrb[0].mxu0
  %495 = vmatprep.mubr.bf16.mxu0 0
  %496 = vmatmul.mubr.bf16.gmra.mrb[0].mxu0 %v335
  %v497 = vpop.f32.mrb[0].mxu0
  %v498 = vadd.f32 %v357, %v497
  %v499 = vpop.f32.mrb[0].mxu0
  %v500 = vpop.f32.mrb[0].mxu0
  %v501 = vadd.f32 %v357, %v500
  %v502 = vpop.f32.mrb[0].mxu0
  %503 = vdwg.mxu0
  %v504 = vmul.f32 %v442, 0.01
  %v505 = vmul.f32 %v445, 0.01
  %v506 = vmul.f32 %v450, 0.01
  %v507 = vmul.f32 %v453, 0.01
  %v508 = vmul.f32 %v458, 0.01
  %v509 = vmul.f32 %v461, 0.01
  %v510 = vmul.f32 %v466, 0.01
  %v511 = vmul.f32 %v469, 0.01
  %v512 = vmul.f32 %v474, 0.01
  %v513 = vmul.f32 %v477, 0.01
  %v514 = vmul.f32 %v482, 0.01
  %v515 = vmul.f32 %v485, 0.01
  %v516 = vmul.f32 %v490, 0.01
  %v517 = vmul.f32 %v493, 0.01
  %v518 = vmul.f32 %v498, 0.01
  %v519 = vmul.f32 %v501, 0.01
  %v520 = vmax.f32 %v442, %v504
  %v521 = vmax.f32 %v445, %v505
  %v522 = vmax.f32 %v450, %v506
  %v523 = vmax.f32 %v453, %v507
  %v524 = vmax.f32 %v458, %v508
  %v525 = vmax.f32 %v461, %v509
  %v526 = vmax.f32 %v466, %v510
  %v527 = vmax.f32 %v469, %v511
  %v528 = vmax.f32 %v474, %v512
  %v529 = vmax.f32 %v477, %v513
  %v530 = vmax.f32 %v482, %v514
  %v531 = vmax.f32 %v485, %v515
  %v532 = vmax.f32 %v490, %v516
  %v533 = vmax.f32 %v493, %v517
  %v534 = vmax.f32 %v498, %v518
  %v535 = vmax.f32 %v501, %v519
  %v536 = vpack.c.bf16 %v521, %v520
  %v537 = vpack.c.bf16 %v523, %v522
  %v538 = vpack.c.bf16 %v525, %v524
  %v539 = vpack.c.bf16 %v527, %v526
  %v540 = vpack.c.bf16 %v529, %v528
  %v541 = vpack.c.bf16 %v531, %v530
  %v542 = vpack.c.bf16 %v533, %v532
  %v543 = vpack.c.bf16 %v535, %v534
  %v544 = vld [vmem:[%s5] sm:$0xf]
  %v545 = vld [vmem:[%s5 + $0x4] sm:$0xf]
  %v546 = vld [vmem:[%s5 + $0x8] sm:$0xf]
  %v547 = vld [vmem:[%s5 + $0xc] sm:$0xf]
  %v548 = vld [vmem:[%s5 + $0x10] sm:$0xf]
  %v549 = vld [vmem:[%s5 + $0x14] sm:$0xf]
  %v550 = vld [vmem:[%s5 + $0x18] sm:$0xf]
  %v551 = vld [vmem:[%s5 + $0x1c] sm:$0xf]
  %v552 = vld [vmem:[%s5 + $0x20] sm:$0xf]
  %v553 = vld [vmem:[%s5 + $0x24] sm:$0xf]
  %v554 = vld [vmem:[%s5 + $0x28] sm:$0xf]
  %v555 = vld [vmem:[%s5 + $0x2c] sm:$0xf]
  %v556 = vld [vmem:[%s5 + $0x30] sm:$0xf]
  %v557 = vld [vmem:[%s5 + $0x34] sm:$0xf]
  %v558 = vld [vmem:[%s5 + $0x38] sm:$0xf]
  %v559 = vld [vmem:[%s5 + $0x3c] sm:$0xf]
  %v560 = vld [vmem:[%s6] sm:$0x1]
  %v562 = vlaneseq
  %v563 = vshrl.u32 %v562, 7
  %v564 = vsub.s32 0, %v563
  %v565 = vrot.slane %v560, %v564
  %v583 = vunpack.c.l.b16 %v544
  %v584 = vunpack.c.l.b16 %v545
  %v585 = vunpack.c.l.b16 %v546
  %v586 = vunpack.c.l.b16 %v547
  %v587 = vunpack.c.l.b16 %v548
  %v588 = vunpack.c.l.b16 %v549
  %v589 = vunpack.c.l.b16 %v550
  %v590 = vunpack.c.l.b16 %v551
  %v591 = vunpack.c.l.b16 %v552
  %v592 = vunpack.c.l.b16 %v553
  %v593 = vunpack.c.l.b16 %v554
  %v594 = vunpack.c.l.b16 %v555
  %v595 = vunpack.c.l.b16 %v556
  %v596 = vunpack.c.l.b16 %v557
  %v597 = vunpack.c.l.b16 %v558
  %v598 = vunpack.c.l.b16 %v559
  %v599 = vpack.c.b16 %v584, %v583
  %v600 = vpack.c.b16 %v586, %v585
  %v601 = vpack.c.b16 %v588, %v587
  %v602 = vpack.c.b16 %v590, %v589
  %v603 = vpack.c.b16 %v592, %v591
  %v604 = vpack.c.b16 %v594, %v593
  %v605 = vpack.c.b16 %v596, %v595
  %v606 = vpack.c.b16 %v598, %v597
  %615 = vmatprep.subr.bf16.mxu0 0
  %616 = vmatpush1.bf16.msra.mxu0 %v599
  %617 = vmatprep.subr.bf16.mxu0 0
  %618 = vmatpush1.bf16.msra.mxu0 %v600
  %619 = vmatprep.subr.bf16.mxu0 0
  %620 = vmatpush1.bf16.msra.mxu0 %v601
  %621 = vmatprep.subr.bf16.mxu0 0
  %622 = vmatpush1.bf16.msra.mxu0 %v602
  %623 = vmatprep.subr.bf16.mxu0 0
  %624 = vmatpush1.bf16.msra.mxu0 %v603
  %625 = vmatprep.subr.bf16.mxu0 0
  %626 = vmatpush1.bf16.msra.mxu0 %v604
  %627 = vmatprep.subr.bf16.mxu0 0
  %628 = vmatpush1.bf16.msra.mxu0 %v605
  %629 = vmatprep.subr.bf16.mxu0 0
  %630 = vmatpush1.bf16.msra.mxu0 %v606
  %631 = vmatprep.subr.bf16.mxu0 0
  %632 = vmatpush1.bf16.msra.mxu0 0
  %633 = vmatprep.subr.bf16.mxu0 0
  %634 = vmatpush1.bf16.msra.mxu0 0
  %635 = vmatprep.subr.bf16.mxu0 0
  %636 = vmatpush1.bf16.msra.mxu0 0
  %637 = vmatprep.subr.bf16.mxu0 0
  %638 = vmatpush1.bf16.msra.mxu0 0
  %639 = vmatprep.subr.bf16.mxu0 0
  %640 = vmatpush1.bf16.msra.mxu0 0
  %641 = vmatprep.subr.bf16.mxu0 0
  %642 = vmatpush1.bf16.msra.mxu0 0
  %643 = vmatprep.subr.bf16.mxu0 0
  %644 = vmatpush1.bf16.msra.mxu0 0
  %645 = vmatprep.subr.bf16.mxu0 0
  %646 = vmatpush1.bf16.msra.mxu0 0
  %647 = vmatprep.mubr.bf16.mxu0 0
  %648 = vmatmul.mubr.bf16.gmra.mrb[0].mxu0 %v536
  %v649 = vpop.f32.mrb[0].mxu0
  %v650 = vadd.f32 %v565, %v649
  %v651 = vpop.f32.mrb[0].mxu0
  %v652 = vpop.f32.mrb[0].mxu0
  %v653 = vadd.f32 %v565, %v652
  %v654 = vpop.f32.mrb[0].mxu0
  %655 = vmatprep.mubr.bf16.mxu0 0
  %656 = vmatmul.mubr.bf16.gmra.mrb[0].mxu0 %v537
  %v657 = vpop.f32.mrb[0].mxu0
  %v658 = vadd.f32 %v565, %v657
  %v659 = vpop.f32.mrb[0].mxu0
  %v660 = vpop.f32.mrb[0].mxu0
  %v661 = vadd.f32 %v565, %v660
  %v662 = vpop.f32.mrb[0].mxu0
  %663 = vmatprep.mubr.bf16.mxu0 0
  %664 = vmatmul.mubr.bf16.gmra.mrb[0].mxu0 %v538
  %v665 = vpop.f32.mrb[0].mxu0
  %v666 = vadd.f32 %v565, %v665
  %v667 = vpop.f32.mrb[0].mxu0
  %v668 = vpop.f32.mrb[0].mxu0
  %v669 = vadd.f32 %v565, %v668
  %v670 = vpop.f32.mrb[0].mxu0
  %671 = vmatprep.mubr.bf16.mxu0 0
  %672 = vmatmul.mubr.bf16.gmra.mrb[0].mxu0 %v539
  %v673 = vpop.f32.mrb[0].mxu0
  %v674 = vadd.f32 %v565, %v673
  %v675 = vpop.f32.mrb[0].mxu0
  %v676 = vpop.f32.mrb[0].mxu0
  %v677 = vadd.f32 %v565, %v676
  %v678 = vpop.f32.mrb[0].mxu0
  %679 = vmatprep.mubr.bf16.mxu0 0
  %680 = vmatmul.mubr.bf16.gmra.mrb[0].mxu0 %v540
  %v681 = vpop.f32.mrb[0].mxu0
  %v682 = vadd.f32 %v565, %v681
  %v683 = vpop.f32.mrb[0].mxu0
  %v684 = vpop.f32.mrb[0].mxu0
  %v685 = vadd.f32 %v565, %v684
  %v686 = vpop.f32.mrb[0].mxu0
  %687 = vmatprep.mubr.bf16.mxu0 0
  %688 = vmatmul.mubr.bf16.gmra.mrb[0].mxu0 %v541
  %v689 = vpop.f32.mrb[0].mxu0
  %v690 = vadd.f32 %v565, %v689
  %v691 = vpop.f32.mrb[0].mxu0
  %v692 = vpop.f32.mrb[0].mxu0
  %v693 = vadd.f32 %v565, %v692
  %v694 = vpop.f32.mrb[0].mxu0
  %695 = vmatprep.mubr.bf16.mxu0 0
  %696 = vmatmul.mubr.bf16.gmra.mrb[0].mxu0 %v542
  %v697 = vpop.f32.mrb[0].mxu0
  %v698 = vadd.f32 %v565, %v697
  %v699 = vpop.f32.mrb[0].mxu0
  %v700 = vpop.f32.mrb[0].mxu0
  %v701 = vadd.f32 %v565, %v700
  %v702 = vpop.f32.mrb[0].mxu0
  %703 = vmatprep.mubr.bf16.mxu0 0
  %704 = vmatmul.mubr.bf16.gmra.mrb[0].mxu0 %v543
  %v705 = vpop.f32.mrb[0].mxu0
  %v706 = vadd.f32 %v565, %v705
  %v707 = vpop.f32.mrb[0].mxu0
  %v708 = vpop.f32.mrb[0].mxu0
  %v709 = vadd.f32 %v565, %v708
  %v710 = vpop.f32.mrb[0].mxu0
  %711 = vdwg.mxu0
  %v712 = vmul.f32 %v650, 0.01
  %v713 = vmul.f32 %v653, 0.01
  %v714 = vmul.f32 %v658, 0.01
  %v715 = vmul.f32 %v661, 0.01
  %v716 = vmul.f32 %v666, 0.01
  %v717 = vmul.f32 %v669, 0.01
  %v718 = vmul.f32 %v674, 0.01
  %v719 = vmul.f32 %v677, 0.01
  %v720 = vmul.f32 %v682, 0.01
  %v721 = vmul.f32 %v685, 0.01
  %v722 = vmul.f32 %v690, 0.01
  %v723 = vmul.f32 %v693, 0.01
  %v724 = vmul.f32 %v698, 0.01
  %v725 = vmul.f32 %v701, 0.01
  %v726 = vmul.f32 %v706, 0.01
  %v727 = vmul.f32 %v709, 0.01
  %v728 = vmax.f32 %v650, %v712
  %v729 = vmax.f32 %v653, %v713
  %v730 = vmax.f32 %v658, %v714
  %v731 = vmax.f32 %v661, %v715
  %v732 = vmax.f32 %v666, %v716
  %v733 = vmax.f32 %v669, %v717
  %v734 = vmax.f32 %v674, %v718
  %v735 = vmax.f32 %v677, %v719
  %v736 = vmax.f32 %v682, %v720
  %v737 = vmax.f32 %v685, %v721
  %v738 = vmax.f32 %v690, %v722
  %v739 = vmax.f32 %v693, %v723
  %v740 = vmax.f32 %v698, %v724
  %v741 = vmax.f32 %v701, %v725
  %v742 = vmax.f32 %v706, %v726
  %v743 = vmax.f32 %v709, %v727
  %v744 = vpack.c.bf16 %v729, %v728
  %v745 = vpack.c.bf16 %v731, %v730
  %v746 = vpack.c.bf16 %v733, %v732
  %v747 = vpack.c.bf16 %v735, %v734
  %v748 = vpack.c.bf16 %v737, %v736
  %v749 = vpack.c.bf16 %v739, %v738
  %v750 = vpack.c.bf16 %v741, %v740
  %v751 = vpack.c.bf16 %v743, %v742
  %v752 = vld [vmem:[%s7] sm:$0xf]
  %v753 = vld [vmem:[%s7 + $0x4] sm:$0xf]
  %v754 = vld [vmem:[%s7 + $0x8] sm:$0xf]
  %v755 = vld [vmem:[%s7 + $0xc] sm:$0xf]
  %v756 = vld [vmem:[%s7 + $0x10] sm:$0xf]
  %v757 = vld [vmem:[%s7 + $0x14] sm:$0xf]
  %v758 = vld [vmem:[%s7 + $0x18] sm:$0xf]
  %v759 = vld [vmem:[%s7 + $0x1c] sm:$0xf]
  %v760 = vld [vmem:[%s7 + $0x20] sm:$0xf]
  %v761 = vld [vmem:[%s7 + $0x24] sm:$0xf]
  %v762 = vld [vmem:[%s7 + $0x28] sm:$0xf]
  %v763 = vld [vmem:[%s7 + $0x2c] sm:$0xf]
  %v764 = vld [vmem:[%s7 + $0x30] sm:$0xf]
  %v765 = vld [vmem:[%s7 + $0x34] sm:$0xf]
  %v766 = vld [vmem:[%s7 + $0x38] sm:$0xf]
  %v767 = vld [vmem:[%s7 + $0x3c] sm:$0xf]
  %v768 = vld [vmem:[%s8] sm:$0x1]
  %v770 = vlaneseq
  %v771 = vshrl.u32 %v770, 7
  %v772 = vsub.s32 0, %v771
  %v773 = vrot.slane %v768, %v772
  %v791 = vunpack.c.l.b16 %v752
  %v792 = vunpack.c.l.b16 %v753
  %v793 = vunpack.c.l.b16 %v754
  %v794 = vunpack.c.l.b16 %v755
  %v795 = vunpack.c.l.b16 %v756
  %v796 = vunpack.c.l.b16 %v757
  %v797 = vunpack.c.l.b16 %v758
  %v798 = vunpack.c.l.b16 %v759
  %v799 = vunpack.c.l.b16 %v760
  %v800 = vunpack.c.l.b16 %v761
  %v801 = vunpack.c.l.b16 %v762
  %v802 = vunpack.c.l.b16 %v763
  %v803 = vunpack.c.l.b16 %v764
  %v804 = vunpack.c.l.b16 %v765
  %v805 = vunpack.c.l.b16 %v766
  %v806 = vunpack.c.l.b16 %v767
  %v807 = vpack.c.b16 %v792, %v791
  %v808 = vpack.c.b16 %v794, %v793
  %v809 = vpack.c.b16 %v796, %v795
  %v810 = vpack.c.b16 %v798, %v797
  %v811 = vpack.c.b16 %v800, %v799
  %v812 = vpack.c.b16 %v802, %v801
  %v813 = vpack.c.b16 %v804, %v803
  %v814 = vpack.c.b16 %v806, %v805
  %823 = vmatprep.subr.bf16.mxu0 0
  %824 = vmatpush1.bf16.msra.mxu0 %v807
  %825 = vmatprep.subr.bf16.mxu0 0
  %826 = vmatpush1.bf16.msra.mxu0 %v808
  %827 = vmatprep.subr.bf16.mxu0 0
  %828 = vmatpush1.bf16.msra.mxu0 %v809
  %829 = vmatprep.subr.bf16.mxu0 0
  %830 = vmatpush1.bf16.msra.mxu0 %v810
  %831 = vmatprep.subr.bf16.mxu0 0
  %832 = vmatpush1.bf16.msra.mxu0 %v811
  %833 = vmatprep.subr.bf16.mxu0 0
  %834 = vmatpush1.bf16.msra.mxu0 %v812
  %835 = vmatprep.subr.bf16.mxu0 0
  %836 = vmatpush1.bf16.msra.mxu0 %v813
  %837 = vmatprep.subr.bf16.mxu0 0
  %838 = vmatpush1.bf16.msra.mxu0 %v814
  %839 = vmatprep.subr.bf16.mxu0 0
  %840 = vmatpush1.bf16.msra.mxu0 0
  %841 = vmatprep.subr.bf16.mxu0 0
  %842 = vmatpush1.bf16.msra.mxu0 0
  %843 = vmatprep.subr.bf16.mxu0 0
  %844 = vmatpush1.bf16.msra.mxu0 0
  %845 = vmatprep.subr.bf16.mxu0 0
  %846 = vmatpush1.bf16.msra.mxu0 0
  %847 = vmatprep.subr.bf16.mxu0 0
  %848 = vmatpush1.bf16.msra.mxu0 0
  %849 = vmatprep.subr.bf16.mxu0 0
  %850 = vmatpush1.bf16.msra.mxu0 0
  %851 = vmatprep.subr.bf16.mxu0 0
  %852 = vmatpush1.bf16.msra.mxu0 0
  %853 = vmatprep.subr.bf16.mxu0 0
  %854 = vmatpush1.bf16.msra.mxu0 0
  %855 = vmatprep.mubr.bf16.mxu0 0
  %856 = vmatmul.mubr.bf16.gmra.mrb[0].mxu0 %v744
  %v857 = vpop.f32.mrb[0].mxu0
  %v858 = vadd.f32 %v773, %v857
  %v859 = vpop.f32.mrb[0].mxu0
  %v860 = vpop.f32.mrb[0].mxu0
  %v861 = vadd.f32 %v773, %v860
  %v862 = vpop.f32.mrb[0].mxu0
  %863 = vmatprep.mubr.bf16.mxu0 0
  %864 = vmatmul.mubr.bf16.gmra.mrb[0].mxu0 %v745
  %v865 = vpop.f32.mrb[0].mxu0
  %v866 = vadd.f32 %v773, %v865
  %v867 = vpop.f32.mrb[0].mxu0
  %v868 = vpop.f32.mrb[0].mxu0
  %v869 = vadd.f32 %v773, %v868
  %v870 = vpop.f32.mrb[0].mxu0
  %871 = vmatprep.mubr.bf16.mxu0 0
  %872 = vmatmul.mubr.bf16.gmra.mrb[0].mxu0 %v746
  %v873 = vpop.f32.mrb[0].mxu0
  %v874 = vadd.f32 %v773, %v873
  %v875 = vpop.f32.mrb[0].mxu0
  %v876 = vpop.f32.mrb[0].mxu0
  %v877 = vadd.f32 %v773, %v876
  %v878 = vpop.f32.mrb[0].mxu0
  %879 = vmatprep.mubr.bf16.mxu0 0
  %880 = vmatmul.mubr.bf16.gmra.mrb[0].mxu0 %v747
  %v881 = vpop.f32.mrb[0].mxu0
  %v882 = vadd.f32 %v773, %v881
  %v883 = vpop.f32.mrb[0].mxu0
  %v884 = vpop.f32.mrb[0].mxu0
  %v885 = vadd.f32 %v773, %v884
  %v886 = vpop.f32.mrb[0].mxu0
  %887 = vmatprep.mubr.bf16.mxu0 0
  %888 = vmatmul.mubr.bf16.gmra.mrb[0].mxu0 %v748
  %v889 = vpop.f32.mrb[0].mxu0
  %v890 = vadd.f32 %v773, %v889
  %v891 = vpop.f32.mrb[0].mxu0
  %v892 = vpop.f32.mrb[0].mxu0
  %v893 = vadd.f32 %v773, %v892
  %v894 = vpop.f32.mrb[0].mxu0
  %895 = vmatprep.mubr.bf16.mxu0 0
  %896 = vmatmul.mubr.bf16.gmra.mrb[0].mxu0 %v749
  %v897 = vpop.f32.mrb[0].mxu0
  %v898 = vadd.f32 %v773, %v897
  %v899 = vpop.f32.mrb[0].mxu0
  %v900 = vpop.f32.mrb[0].mxu0
  %v901 = vadd.f32 %v773, %v900
  %v902 = vpop.f32.mrb[0].mxu0
  %903 = vmatprep.mubr.bf16.mxu0 0
  %904 = vmatmul.mubr.bf16.gmra.mrb[0].mxu0 %v750
  %v905 = vpop.f32.mrb[0].mxu0
  %v906 = vadd.f32 %v773, %v905
  %v907 = vpop.f32.mrb[0].mxu0
  %v908 = vpop.f32.mrb[0].mxu0
  %v909 = vadd.f32 %v773, %v908
  %v910 = vpop.f32.mrb[0].mxu0
  %911 = vmatprep.mubr.bf16.mxu0 0
  %912 = vmatmul.mubr.bf16.gmra.mrb[0].mxu0 %v751
  %v913 = vpop.f32.mrb[0].mxu0
  %v914 = vadd.f32 %v773, %v913
  %v915 = vpop.f32.mrb[0].mxu0
  %v916 = vpop.f32.mrb[0].mxu0
  %v917 = vadd.f32 %v773, %v916
  %v918 = vpop.f32.mrb[0].mxu0
  %919 = vdwg.mxu0
  %v920 = vmul.f32 %v858, 0.01
  %v921 = vmul.f32 %v861, 0.01
  %v922 = vmul.f32 %v866, 0.01
  %v923 = vmul.f32 %v869, 0.01
  %v924 = vmul.f32 %v874, 0.01
  %v925 = vmul.f32 %v877, 0.01
  %v926 = vmul.f32 %v882, 0.01
  %v927 = vmul.f32 %v885, 0.01
  %v928 = vmul.f32 %v890, 0.01
  %v929 = vmul.f32 %v893, 0.01
  %v930 = vmul.f32 %v898, 0.01
  %v931 = vmul.f32 %v901, 0.01
  %v932 = vmul.f32 %v906, 0.01
  %v933 = vmul.f32 %v909, 0.01
  %v934 = vmul.f32 %v914, 0.01
  %v935 = vmul.f32 %v917, 0.01
  %v936 = vmax.f32 %v858, %v920
  %v937 = vmax.f32 %v861, %v921
  %v938 = vmax.f32 %v866, %v922
  %v939 = vmax.f32 %v869, %v923
  %v940 = vmax.f32 %v874, %v924
  %v941 = vmax.f32 %v877, %v925
  %v942 = vmax.f32 %v882, %v926
  %v943 = vmax.f32 %v885, %v927
  %v944 = vmax.f32 %v890, %v928
  %v945 = vmax.f32 %v893, %v929
  %v946 = vmax.f32 %v898, %v930
  %v947 = vmax.f32 %v901, %v931
  %v948 = vmax.f32 %v906, %v932
  %v949 = vmax.f32 %v909, %v933
  %v950 = vmax.f32 %v914, %v934
  %v951 = vmax.f32 %v917, %v935
  %v952 = vpack.c.bf16 %v937, %v936
  %v953 = vpack.c.bf16 %v939, %v938
  %v954 = vpack.c.bf16 %v941, %v940
  %v955 = vpack.c.bf16 %v943, %v942
  %v956 = vpack.c.bf16 %v945, %v944
  %v957 = vpack.c.bf16 %v947, %v946
  %v958 = vpack.c.bf16 %v949, %v948
  %v959 = vpack.c.bf16 %v951, %v950
  %v960 = vld [vmem:[%s9] sm:$0xf]
  %v961 = vld [vmem:[%s9 + $0x4] sm:$0xf]
  %v962 = vld [vmem:[%s9 + $0x8] sm:$0xf]
  %v963 = vld [vmem:[%s9 + $0xc] sm:$0xf]
  %v964 = vld [vmem:[%s9 + $0x10] sm:$0xf]
  %v965 = vld [vmem:[%s9 + $0x14] sm:$0xf]
  %v966 = vld [vmem:[%s9 + $0x18] sm:$0xf]
  %v967 = vld [vmem:[%s9 + $0x1c] sm:$0xf]
  %v968 = vld [vmem:[%s9 + $0x20] sm:$0xf]
  %v969 = vld [vmem:[%s9 + $0x24] sm:$0xf]
  %v970 = vld [vmem:[%s9 + $0x28] sm:$0xf]
  %v971 = vld [vmem:[%s9 + $0x2c] sm:$0xf]
  %v972 = vld [vmem:[%s9 + $0x30] sm:$0xf]
  %v973 = vld [vmem:[%s9 + $0x34] sm:$0xf]
  %v974 = vld [vmem:[%s9 + $0x38] sm:$0xf]
  %v975 = vld [vmem:[%s9 + $0x3c] sm:$0xf]
  %v976 = vld [vmem:[%s10] sm:$0x1]
  %v978 = vlaneseq
  %v979 = vshrl.u32 %v978, 7
  %v980 = vsub.s32 0, %v979
  %v981 = vrot.slane %v976, %v980
  %v999 = vunpack.c.l.b16 %v960
  %v1000 = vunpack.c.l.b16 %v961
  %v1001 = vunpack.c.l.b16 %v962
  %v1002 = vunpack.c.l.b16 %v963
  %v1003 = vunpack.c.l.b16 %v964
  %v1004 = vunpack.c.l.b16 %v965
  %v1005 = vunpack.c.l.b16 %v966
  %v1006 = vunpack.c.l.b16 %v967
  %v1007 = vunpack.c.l.b16 %v968
  %v1008 = vunpack.c.l.b16 %v969
  %v1009 = vunpack.c.l.b16 %v970
  %v1010 = vunpack.c.l.b16 %v971
  %v1011 = vunpack.c.l.b16 %v972
  %v1012 = vunpack.c.l.b16 %v973
  %v1013 = vunpack.c.l.b16 %v974
  %v1014 = vunpack.c.l.b16 %v975
  %v1015 = vpack.c.b16 %v1000, %v999
  %v1016 = vpack.c.b16 %v1002, %v1001
  %v1017 = vpack.c.b16 %v1004, %v1003
  %v1018 = vpack.c.b16 %v1006, %v1005
  %v1019 = vpack.c.b16 %v1008, %v1007
  %v1020 = vpack.c.b16 %v1010, %v1009
  %v1021 = vpack.c.b16 %v1012, %v1011
  %v1022 = vpack.c.b16 %v1014, %v1013
  %1031 = vmatprep.subr.bf16.mxu0 0
  %1032 = vmatpush1.bf16.msra.mxu0 %v1015
  %1033 = vmatprep.subr.bf16.mxu0 0
  %1034 = vmatpush1.bf16.msra.mxu0 %v1016
  %1035 = vmatprep.subr.bf16.mxu0 0
  %1036 = vmatpush1.bf16.msra.mxu0 %v1017
  %1037 = vmatprep.subr.bf16.mxu0 0
  %1038 = vmatpush1.bf16.msra.mxu0 %v1018
  %1039 = vmatprep.subr.bf16.mxu0 0
  %1040 = vmatpush1.bf16.msra.mxu0 %v1019
  %1041 = vmatprep.subr.bf16.mxu0 0
  %1042 = vmatpush1.bf16.msra.mxu0 %v1020
  %1043 = vmatprep.subr.bf16.mxu0 0
  %1044 = vmatpush1.bf16.msra.mxu0 %v1021
  %1045 = vmatprep.subr.bf16.mxu0 0
  %1046 = vmatpush1.bf16.msra.mxu0 %v1022
  %1047 = vmatprep.subr.bf16.mxu0 0
  %1048 = vmatpush1.bf16.msra.mxu0 0
  %1049 = vmatprep.subr.bf16.mxu0 0
  %1050 = vmatpush1.bf16.msra.mxu0 0
  %1051 = vmatprep.subr.bf16.mxu0 0
  %1052 = vmatpush1.bf16.msra.mxu0 0
  %1053 = vmatprep.subr.bf16.mxu0 0
  %1054 = vmatpush1.bf16.msra.mxu0 0
  %1055 = vmatprep.subr.bf16.mxu0 0
  %1056 = vmatpush1.bf16.msra.mxu0 0
  %1057 = vmatprep.subr.bf16.mxu0 0
  %1058 = vmatpush1.bf16.msra.mxu0 0
  %1059 = vmatprep.subr.bf16.mxu0 0
  %1060 = vmatpush1.bf16.msra.mxu0 0
  %1061 = vmatprep.subr.bf16.mxu0 0
  %1062 = vmatpush1.bf16.msra.mxu0 0
  %1063 = vmatprep.mubr.bf16.mxu0 0
  %1064 = vmatmul.mubr.bf16.gmra.mrb[0].mxu0 %v952
  %v1065 = vpop.f32.mrb[0].mxu0
  %v1066 = vadd.f32 %v981, %v1065
  %v1067 = vpop.f32.mrb[0].mxu0
  %v1068 = vpop.f32.mrb[0].mxu0
  %v1069 = vadd.f32 %v981, %v1068
  %v1070 = vpop.f32.mrb[0].mxu0
  %1071 = vmatprep.mubr.bf16.mxu0 0
  %1072 = vmatmul.mubr.bf16.gmra.mrb[0].mxu0 %v953
  %v1073 = vpop.f32.mrb[0].mxu0
  %v1074 = vadd.f32 %v981, %v1073
  %v1075 = vpop.f32.mrb[0].mxu0
  %v1076 = vpop.f32.mrb[0].mxu0
  %v1077 = vadd.f32 %v981, %v1076
  %v1078 = vpop.f32.mrb[0].mxu0
  %1079 = vmatprep.mubr.bf16.mxu0 0
  %1080 = vmatmul.mubr.bf16.gmra.mrb[0].mxu0 %v954
  %v1081 = vpop.f32.mrb[0].mxu0
  %v1082 = vadd.f32 %v981, %v1081
  %v1083 = vpop.f32.mrb[0].mxu0
  %v1084 = vpop.f32.mrb[0].mxu0
  %v1085 = vadd.f32 %v981, %v1084
  %v1086 = vpop.f32.mrb[0].mxu0
  %1087 = vmatprep.mubr.bf16.mxu0 0
  %1088 = vmatmul.mubr.bf16.gmra.mrb[0].mxu0 %v955
  %v1089 = vpop.f32.mrb[0].mxu0
  %v1090 = vadd.f32 %v981, %v1089
  %v1091 = vpop.f32.mrb[0].mxu0
  %v1092 = vpop.f32.mrb[0].mxu0
  %v1093 = vadd.f32 %v981, %v1092
  %v1094 = vpop.f32.mrb[0].mxu0
  %1095 = vmatprep.mubr.bf16.mxu0 0
  %1096 = vmatmul.mubr.bf16.gmra.mrb[0].mxu0 %v956
  %v1097 = vpop.f32.mrb[0].mxu0
  %v1098 = vadd.f32 %v981, %v1097
  %v1099 = vpop.f32.mrb[0].mxu0
  %v1100 = vpop.f32.mrb[0].mxu0
  %v1101 = vadd.f32 %v981, %v1100
  %v1102 = vpop.f32.mrb[0].mxu0
  %1103 = vmatprep.mubr.bf16.mxu0 0
  %1104 = vmatmul.mubr.bf16.gmra.mrb[0].mxu0 %v957
  %v1105 = vpop.f32.mrb[0].mxu0
  %v1106 = vadd.f32 %v981, %v1105
  %v1107 = vpop.f32.mrb[0].mxu0
  %v1108 = vpop.f32.mrb[0].mxu0
  %v1109 = vadd.f32 %v981, %v1108
  %v1110 = vpop.f32.mrb[0].mxu0
  %1111 = vmatprep.mubr.bf16.mxu0 0
  %1112 = vmatmul.mubr.bf16.gmra.mrb[0].mxu0 %v958
  %v1113 = vpop.f32.mrb[0].mxu0
  %v1114 = vadd.f32 %v981, %v1113
  %v1115 = vpop.f32.mrb[0].mxu0
  %v1116 = vpop.f32.mrb[0].mxu0
  %v1117 = vadd.f32 %v981, %v1116
  %v1118 = vpop.f32.mrb[0].mxu0
  %1119 = vmatprep.mubr.bf16.mxu0 0
  %1120 = vmatmul.mubr.bf16.gmra.mrb[0].mxu0 %v959
  %v1121 = vpop.f32.mrb[0].mxu0
  %v1122 = vadd.f32 %v981, %v1121
  %v1123 = vpop.f32.mrb[0].mxu0
  %v1124 = vpop.f32.mrb[0].mxu0
  %v1125 = vadd.f32 %v981, %v1124
  %v1126 = vpop.f32.mrb[0].mxu0
  %1127 = vdwg.mxu0
  %1128 = vst [vmem:[%s11] sm:$0xff] %v1066
  %1129 = vst [vmem:[%s11 + $0x8] sm:$0xff] %v1069
  %1130 = vst [vmem:[%s11 + $0x10] sm:$0xff] %v1074
  %1131 = vst [vmem:[%s11 + $0x18] sm:$0xff] %v1077
  %1132 = vst [vmem:[%s11 + $0x20] sm:$0xff] %v1082
  %1133 = vst [vmem:[%s11 + $0x28] sm:$0xff] %v1085
  %1134 = vst [vmem:[%s11 + $0x30] sm:$0xff] %v1090
  %1135 = vst [vmem:[%s11 + $0x38] sm:$0xff] %v1093
  %1136 = vst [vmem:[%s11 + $0x40] sm:$0xff] %v1098
  %1137 = vst [vmem:[%s11 + $0x48] sm:$0xff] %v1101
  %1138 = vst [vmem:[%s11 + $0x50] sm:$0xff] %v1106
  %1139 = vst [vmem:[%s11 + $0x58] sm:$0xff] %v1109
  %1140 = vst [vmem:[%s11 + $0x60] sm:$0xff] %v1114
  %1141 = vst [vmem:[%s11 + $0x68] sm:$0xff] %v1117
  %1142 = vst [vmem:[%s11 + $0x70] sm:$0xff] %v1122
  %1143 = vst [vmem:[%s11 + $0x78] sm:$0xff] %v1125
  // Predicated region
  $region46: #{g_func_forward.1} parent=0 // pred_check
    _
  $region47: #{g_func_forward.1} parent=0 // pred_check_branch
    %1145 = sbr.rel (0) target = $region49
  $region48: #{g_func_forward.1} parent=0 // pred_region
    _
  $region49: #{g_func_forward.1} parent=0 // pred_fallthru
    _
  // Predicated region
  $region50: #{g_func_forward.1} parent=0 // pred_check
    _
  $region51: #{g_func_forward.1} parent=0 // pred_check_branch
    %1147 = sbr.rel (0) target = $region53
  $region52: #{g_func_forward.1} parent=0 // pred_region
    _
  $region53: #{g_func_forward.1} parent=0 // pred_fallthru
    _

</llo_original>
